<compile_context>
chip_gen: v5e
topology: v5e:2x2
jax: 0.10.0
libtpu: 0.0.40
codegen_flags: <defaults>
</compile_context>

<pallas_src>
from functools import partial

import jax
import jax.numpy as jnp
from jax.experimental import pallas as pl
from jax.experimental.pallas import tpu as pltpu


def _sigmoid(z):
    # Single EUP tanh push (mathematically identical to 1/(1+exp(-z))).
    return 0.5 * jnp.tanh(0.5 * z) + 0.5


def _autoencoder_kernel(x_ref, wg_ref, bg_ref, wh_ref, bh_ref, o_ref):
    x = x_ref[...]
    if x.dtype != wg_ref.dtype:        # no-op when the producer already emits bf16
        x = x.astype(wg_ref.dtype)

    # hidden = sigmoid(x @ Wg + bg); Wg pre-transposed to (Q, KP) -> MXU-native dot.
    h = jnp.dot(x, wg_ref[...], preferred_element_type=jnp.float32)
    h = _sigmoid(h + bg_ref[...])      # f32 VPU/EUP math, bg (1, KP) broadcasts
    h = h.astype(wh_ref.dtype)         # bf16 MXU operand for the second layer
    # TODO(synk): on v6e/v7x the first sigmoid could run in bf16 (h is cast right
    # after anyway); kept f32 so the identical kernel stays optimal on v5e.

    # out = sigmoid(hidden @ Wh + bh); Wh pre-transposed to (KP, Q).
    o = jnp.dot(h, wh_ref[...], preferred_element_type=jnp.float32)
    o = _sigmoid(o + bh_ref[...])      # bh (1, Q) broadcasts
    o_ref[...] = o.astype(o_ref.dtype)


def prepare_params(g_weight, g_bias, h_weight, h_bias,
                   param_dtype=jnp.bfloat16, lane=128):
    """One-time prep (call OUTSIDE jit): bf16 cast + transpose + zero-pad k.

    g_weight: (k, Q) = nn.Linear(Q, k).weight   ->  wg: (Q, KP)
    h_weight: (Q, k) = nn.Linear(k, Q).weight   ->  wh: (KP, Q)
    """
    k, q = g_weight.shape
    assert h_weight.shape == (q, k)
    kp = ((k + lane - 1) // lane) * lane
    wg = jnp.zeros((q, kp), param_dtype).at[:, :k].set(g_weight.T.astype(param_dtype))
    bg = jnp.zeros((1, kp), jnp.float32).at[:, :k].set(g_bias.astype(jnp.float32))
    wh = jnp.zeros((kp, q), param_dtype).at[:k, :].set(h_weight.T.astype(param_dtype))
    bh = h_bias.reshape(1, q).astype(jnp.float32)
    # Padded-hidden correctness depends on these staying exactly zero:
    # hidden[:, k:] = sigmoid(0) = 0.5, multiplied by exactly-zero wh rows -> 0.
    assert bool(jnp.all(wg[:, k:] == 0)), "wg padding must be exactly zero"
    assert bool(jnp.all(bg[:, k:] == 0)), "bg padding must be exactly zero"
    assert bool(jnp.all(wh[k:, :] == 0)), "wh padding must be exactly zero"
    return wg, bg, wh, bh


def _round_up(v, m):
    return ((v + m - 1) // m) * m


@partial(jax.jit, static_argnames=("out_dtype",))
def autoencoder_forward(x, wg, bg, wh, bh, out_dtype=jnp.bfloat16):
    """x: (B, Q) bf16 (preferred) or f32; wg: (Q, KP) bf16; bg: (1, KP) f32;
    wh: (KP, Q) bf16; bh: (1, Q) f32. Returns (B, Q) in out_dtype (bf16 default)."""
    B, Q = x.shape
    KP = wg.shape[1]
    if Q % 128 != 0:
        # TODO(synk): for the real model, pad num_question up to a multiple of
        # 128 (weights + biases + x) and slice the output outside the kernel.
        raise ValueError("num_question must be a multiple of 128 for lane-dense layout")

    # >= 2 grid steps once B >= 16 (v7x dual-TC sharding), capped at 1024 rows.
    if B >= 16:
        TB = min(1024, _round_up(pl.cdiv(B, 2), 8))
    else:
        TB = B
    grid = (pl.cdiv(B, TB),)

    out_bytes = B * Q * jnp.dtype(out_dtype).itemsize
    cost = pl.CostEstimate(
        flops=4 * B * Q * KP,                       # two matmuls
        transcendentals=B * (KP + Q),               # one tanh per activation
        bytes_accessed=int(x.size * x.dtype.itemsize
                           + wg.size * wg.dtype.itemsize
                           + wh.size * wh.dtype.itemsize
                           + bg.size * 4 + bh.size * 4 + out_bytes))

    return pl.pallas_call(
        _autoencoder_kernel,
        out_shape=jax.ShapeDtypeStruct((B, Q), out_dtype),
        grid_spec=pltpu.PrefetchScalarGridSpec(
            num_scalar_prefetch=0,
            grid=grid,
            in_specs=[
                pl.BlockSpec((TB, Q), lambda i: (i, 0)),   # x: streamed per batch tile
                pl.BlockSpec((Q, KP), lambda i: (0, 0)),   # wg: VMEM-resident
                pl.BlockSpec((1, KP), lambda i: (0, 0)),   # bg: VMEM-resident
                pl.BlockSpec((KP, Q), lambda i: (0, 0)),   # wh: VMEM-resident
                pl.BlockSpec((1, Q), lambda i: (0, 0)),    # bh: VMEM-resident
            ],
            out_specs=pl.BlockSpec((TB, Q), lambda i: (i, 0)),
        ),
        compiler_params=pltpu.CompilerParams(
            dimension_semantics=("parallel",),     # shards batch across TCs on v7x
            vmem_limit_bytes=32 * 1024 * 1024),
        cost_estimate=cost,
    )(x, wg, bg, wh, bh)


def _init_linear(key, out_features, in_features):
    """Deterministic init mimicking nn.Linear: U(-1/sqrt(in), 1/sqrt(in))."""
    kw, kb = jax.random.split(key)
    bound = 1.0 / jnp.sqrt(jnp.float32(in_features))
    w = jax.random.uniform(kw, (out_features, in_features), jnp.float32,
                           minval=-bound, maxval=bound)
    b = jax.random.uniform(kb, (out_features,), jnp.float32,
                           minval=-bound, maxval=bound)
    return w, b


if __name__ == "__main__":
    NUM_QUESTION = 128   # num_question (feature / lane dim)
    K = 32               # latent dim k (zero-padded to 128 in prepare_params)

    key = jax.random.PRNGKey(0)
    kx, kg, kh, kx2 = jax.random.split(key, 4)

    g_w, g_b = _init_linear(kg, K, NUM_QUESTION)     # nn.Linear(num_question, k)
    h_w, h_b = _init_linear(kh, NUM_QUESTION, K)     # nn.Linear(k, num_question)

    # One-time weight prep outside the jitted forward (transpose + pad + bf16).
    wg, bg, wh, bh = prepare_params(g_w, g_b, h_w, h_b)

    def mirrored_ref(x_bf16):
        """Pure-JAX reference mirroring kernel dtypes (bf16 operands, f32 acc)."""
        xf = x_bf16.astype(jnp.float32)
        wgf, whf = wg.astype(jnp.float32), wh.astype(jnp.float32)
        h = jax.nn.sigmoid(xf @ wgf + bg)
        h = h.astype(jnp.bfloat16).astype(jnp.float32)
        return jax.nn.sigmoid(h @ whf + bh)

    # ---- main test: B = 8 users (single grid step) ----
    B = 8
    x = jax.random.normal(kx, (B, NUM_QUESTION), jnp.float32).astype(jnp.bfloat16)
    out = jax.block_until_ready(autoencoder_forward(x, wg, bg, wh, bh))
    assert out.shape == (B, NUM_QUESTION) and out.dtype == jnp.bfloat16
    out_f = out.astype(jnp.float32)

    # (1) Mirrored reference (same bf16 operands) — only bf16 output rounding differs.
    assert jnp.allclose(out_f, mirrored_ref(x), atol=5e-3), "mismatch vs mirrored ref"

    # (2) Fidelity vs exact f32 torch semantics (looser tol: bf16 weights + bf16 out).
    out_f32 = jax.nn.sigmoid(
        jax.nn.sigmoid(x.astype(jnp.float32) @ g_w.T + g_b) @ h_w.T + h_b)
    assert jnp.allclose(out_f, out_f32, atol=3.5e-2), "mismatch vs f32 reference"

    # ---- ragged-batch test: B = 24 -> TB = 16, grid = (2,), last block ragged ----
    B2 = 24
    x2 = jax.random.normal(kx2, (B2, NUM_QUESTION), jnp.float32).astype(jnp.bfloat16)
    out2 = jax.block_until_ready(autoencoder_forward(x2, wg, bg, wh, bh))
    assert out2.shape == (B2, NUM_QUESTION)
    assert jnp.allclose(out2.astype(jnp.float32), mirrored_ref(x2), atol=5e-3), \
        "ragged-batch mismatch vs mirrored ref"

    print("KERNEL_OK")
</pallas_src>

<mosaic_0001>
module attributes {stable_mosaic.version = 11 : i64} {
  func.func @_autoencoder_kernel(%arg0: i32, %arg1: memref<8x128xbf16, #tpu.memory_space<vmem>>, %arg2: memref<128x128xbf16, #tpu.memory_space<vmem>>, %arg3: memref<1x128xf32, #tpu.memory_space<vmem>>, %arg4: memref<128x128xbf16, #tpu.memory_space<vmem>>, %arg5: memref<1x128xf32, #tpu.memory_space<vmem>>, %arg6: memref<8x128xbf16, #tpu.memory_space<vmem>>) attributes {dimension_semantics = [#tpu.dimension_semantics<parallel>], iteration_bounds = array<i64: 1>, scalar_prefetch = 0 : i64, scratch_operands = 0 : i64, tpu.core_type = #tpu.core_type<tc>, window_params = [{transform_indices = @transform_0, window_bounds = array<i64: 8, 128>}, {pipeline_mode = #tpu.pipeline_mode<synchronous>, transform_indices = @transform_1, window_bounds = array<i64: 128, 128>}, {pipeline_mode = #tpu.pipeline_mode<synchronous>, transform_indices = @transform_2, window_bounds = array<i64: 1, 128>}, {pipeline_mode = #tpu.pipeline_mode<synchronous>, transform_indices = @transform_3, window_bounds = array<i64: 128, 128>}, {pipeline_mode = #tpu.pipeline_mode<synchronous>, transform_indices = @transform_4, window_bounds = array<i64: 1, 128>}, {transform_indices = @transform_5, window_bounds = array<i64: 8, 128>}]} {
    %c0 = arith.constant 0 : index
    %c0_0 = arith.constant 0 : index
    %0 = vector.load %arg1[%c0, %c0_0] : memref<8x128xbf16, #tpu.memory_space<vmem>>, vector<8x128xbf16>
    %c0_1 = arith.constant 0 : index
    %c0_2 = arith.constant 0 : index
    %1 = vector.load %arg2[%c0_1, %c0_2] : memref<128x128xbf16, #tpu.memory_space<vmem>>, vector<128x128xbf16>
    %cst = arith.constant dense<0.000000e+00> : vector<8x128xf32>
    %2 = tpu.matmul %0, %1, %cst {dimension_numbers = #tpu.dot_dimension_numbers<[1], [0], [0], [1], [0, 0, 1, 1], [], []>} : vector<8x128xbf16>, vector<128x128xbf16>, vector<8x128xf32> -> vector<8x128xf32>
    %c0_3 = arith.constant 0 : index
    %c0_4 = arith.constant 0 : index
    %3 = vector.load %arg3[%c0_3, %c0_4] : memref<1x128xf32, #tpu.memory_space<vmem>>, vector<1x128xf32>
    %4 = vector.broadcast %3 : vector<1x128xf32> to vector<8x128xf32>
    %5 = arith.addf %2, %4 : vector<8x128xf32>
    %cst_5 = arith.constant 5.000000e-01 : f32
    %6 = vector.broadcast %cst_5 : f32 to vector<8x128xf32>
    %7 = arith.mulf %6, %5 : vector<8x128xf32>
    %8 = math.tanh %7 : vector<8x128xf32>
    %cst_6 = arith.constant 5.000000e-01 : f32
    %9 = vector.broadcast %cst_6 : f32 to vector<8x128xf32>
    %10 = arith.mulf %9, %8 : vector<8x128xf32>
    %cst_7 = arith.constant 5.000000e-01 : f32
    %11 = vector.broadcast %cst_7 : f32 to vector<8x128xf32>
    %12 = arith.addf %10, %11 : vector<8x128xf32>
    %13 = arith.truncf %12 : vector<8x128xf32> to vector<8x128xbf16>
    %c0_8 = arith.constant 0 : index
    %c0_9 = arith.constant 0 : index
    %14 = vector.load %arg4[%c0_8, %c0_9] : memref<128x128xbf16, #tpu.memory_space<vmem>>, vector<128x128xbf16>
    %cst_10 = arith.constant dense<0.000000e+00> : vector<8x128xf32>
    %15 = tpu.matmul %13, %14, %cst_10 {dimension_numbers = #tpu.dot_dimension_numbers<[1], [0], [0], [1], [0, 0, 1, 1], [], []>} : vector<8x128xbf16>, vector<128x128xbf16>, vector<8x128xf32> -> vector<8x128xf32>
    %c0_11 = arith.constant 0 : index
    %c0_12 = arith.constant 0 : index
    %16 = vector.load %arg5[%c0_11, %c0_12] : memref<1x128xf32, #tpu.memory_space<vmem>>, vector<1x128xf32>
    %17 = vector.broadcast %16 : vector<1x128xf32> to vector<8x128xf32>
    %18 = arith.addf %15, %17 : vector<8x128xf32>
    %cst_13 = arith.constant 5.000000e-01 : f32
    %19 = vector.broadcast %cst_13 : f32 to vector<8x128xf32>
    %20 = arith.mulf %19, %18 : vector<8x128xf32>
    %21 = math.tanh %20 : vector<8x128xf32>
    %cst_14 = arith.constant 5.000000e-01 : f32
    %22 = vector.broadcast %cst_14 : f32 to vector<8x128xf32>
    %23 = arith.mulf %22, %21 : vector<8x128xf32>
    %cst_15 = arith.constant 5.000000e-01 : f32
    %24 = vector.broadcast %cst_15 : f32 to vector<8x128xf32>
    %25 = arith.addf %23, %24 : vector<8x128xf32>
    %26 = arith.truncf %25 : vector<8x128xf32> to vector<8x128xbf16>
    %c0_16 = arith.constant 0 : index
    %c0_17 = arith.constant 0 : index
    %27 = vector.load %arg6[%c0_16, %c0_17] : memref<8x128xbf16, #tpu.memory_space<vmem>>, vector<8x128xbf16>
    tpu.vector_store %arg6[%c0_16, %c0_17], %26 {strides = array<i32>} : memref<8x128xbf16, #tpu.memory_space<vmem>>, vector<8x128xbf16>,
    return
  }
  func.func @transform_0(%arg0: i32) -> (i32, i32) {
    %c0_i32 = arith.constant 0 : i32
    %c0_i32_0 = arith.constant 0 : i32
    return %arg0, %c0_i32 : i32, i32
  }
  func.func @transform_1(%arg0: i32) -> (i32, i32) {
    %c0_i32 = arith.constant 0 : i32
    %c0_i32_0 = arith.constant 0 : i32
    %c0_i32_1 = arith.constant 0 : i32
    return %c0_i32, %c0_i32_0 : i32, i32
  }
  func.func @transform_2(%arg0: i32) -> (i32, i32) {
    %c0_i32 = arith.constant 0 : i32
    %c0_i32_0 = arith.constant 0 : i32
    %c0_i32_1 = arith.constant 0 : i32
    return %c0_i32, %c0_i32_0 : i32, i32
  }
  func.func @transform_3(%arg0: i32) -> (i32, i32) {
    %c0_i32 = arith.constant 0 : i32
    %c0_i32_0 = arith.constant 0 : i32
    %c0_i32_1 = arith.constant 0 : i32
    return %c0_i32, %c0_i32_0 : i32, i32
  }
  func.func @transform_4(%arg0: i32) -> (i32, i32) {
    %c0_i32 = arith.constant 0 : i32
    %c0_i32_0 = arith.constant 0 : i32
    %c0_i32_1 = arith.constant 0 : i32
    return %c0_i32, %c0_i32_0 : i32, i32
  }
  func.func @transform_5(%arg0: i32) -> (i32, i32) {
    %c0_i32 = arith.constant 0 : i32
    %c0_i32_0 = arith.constant 0 : i32
    return %arg0, %c0_i32 : i32, i32
  }
}

</mosaic_0001>

<llo_original>
// kernel: autoencoder_forward.1
$region0: #{autoencoder_forward.1}
  #allocation0 [shape = 'u32[]', space=smem, size = 0x4, offset = 0x4, fixed_abs, tag = 'smem constant byte address 0x4 - core index']
  #allocation1 [shape = 'u32[72,128]{1,0:T(1,128)}', space=vmem, size = 0x9000, scoped, tag = 'internal scratch']
  %s0 = inlined_call_operand.hbm [shape: bf16[8,128], index: 0, kind: input, shape index: {}]
  %s1 = inlined_call_operand.hbm [shape: bf16[128,128], index: 1, kind: input, shape index: {}]
  %s2 = inlined_call_operand.vmem [shape: f32[1,128], index: 2, kind: input, shape index: {}]
  %s3 = inlined_call_operand.hbm [shape: bf16[128,128], index: 3, kind: input, shape index: {}]
  %s4 = inlined_call_operand.vmem [shape: f32[1,128], index: 4, kind: input, shape index: {}]
  %s5 = inlined_call_operand.hbm [shape: bf16[8,128], index: 5, kind: output, shape index: {}]
  %s6 = sld [smem:[#allocation0]]
  $region42: #{autoencoder_forward.1} parent=0
    _
  %s8 = ssub.s32 1, %s6
  %s9 = scalar_select 0, %s8, %s6
  $region1: #{autoencoder_forward.1} parent=0
    #allocation2 [shape = 'u8[2048]{0}', space=vmem, size = 0x800, scoped, tag = 'input window, operand 0, single buffered']
    #allocation3 [shape = 's32[1]{0}', space=sflag, size = 0x4, scoped, tag = 'scoped memory for autoencoder_forward.1']
    #allocation4 [shape = 's32[1]{0}', space=sflag, size = 0x4, scoped, tag = 'scoped memory for autoencoder_forward.1']
    #allocation5 [shape = 'u8[32768]{0}', space=vmem, size = 0x8000, scoped, tag = 'input window, operand 1, single buffered']
    #allocation6 [shape = 's32[1]{0}', space=sflag, size = 0x4, scoped, tag = 'scoped memory for autoencoder_forward.1']
    #allocation7 [shape = 'u8[32768]{0}', space=vmem, size = 0x8000, scoped, tag = 'input window, operand 3, single buffered']
    #allocation8 [shape = 'u8[2048]{0}', space=vmem, size = 0x800, scoped, tag = 'output window, operand 0, single buffered']
    %10 = vsyncpa [#allocation3], 0
    %11 = vsyncpa [#allocation6], 0
    %12 = vsyncpa [#allocation4], 0
    // Predicated region
    $region2: #{autoencoder_forward.1} parent=1 // pred_check
      _
    $region3: #{autoencoder_forward.1} parent=1 // pred_check_branch
      %14 = sbr.rel (0) target = $region5
    $region4: #{autoencoder_forward.1} parent=1 // pred_region
      %16 = vsyncadd [#allocation3], 0
      %s18 = sshll.u32 %s0, 4
      %s19 = int_to_ptr.hbm [resolvable:$true] %s18
      %s20 = sshll.u32 [#allocation2], 4
      %s21 = int_to_ptr.vmem [resolvable:$true] %s20
      %23 = dma.hbm_to_vmem [thread:$0]  %s19, 64, %s21, [#allocation3]
    $region5: #{autoencoder_forward.1} parent=1 // pred_fallthru
      _
    // Predicated region
    $region6: #{autoencoder_forward.1} parent=1 // pred_check
      _
    $region7: #{autoencoder_forward.1} parent=1 // pred_check_branch
      %25 = sbr.rel (0) target = $region9
    $region8: #{autoencoder_forward.1} parent=1 // pred_region
      %27 = vsyncadd [#allocation6], 0
      %s28 = sshll.u32 %s1, 4
      %s29 = int_to_ptr.hbm [resolvable:$true] %s28
      %s30 = sshll.u32 [#allocation5], 4
      %s31 = int_to_ptr.vmem [resolvable:$true] %s30
      %36 = dma.hbm_to_vmem [thread:$0]  %s29, 1024, %s31, [#allocation6], 64, 64, 4
    $region9: #{autoencoder_forward.1} parent=1 // pred_fallthru
      _
    // Predicated region
    $region10: #{autoencoder_forward.1} parent=1 // pred_check
      _
    $region11: #{autoencoder_forward.1} parent=1 // pred_check_branch
      %38 = sbr.rel (0) target = $region13
    $region12: #{autoencoder_forward.1} parent=1 // pred_region
      _
    $region13: #{autoencoder_forward.1} parent=1 // pred_fallthru
      _
    // Predicated region
    $region14: #{autoencoder_forward.1} parent=1 // pred_check
      _
    $region15: #{autoencoder_forward.1} parent=1 // pred_check_branch
      %40 = sbr.rel (0) target = $region17
    $region16: #{autoencoder_forward.1} parent=1 // pred_region
      %42 = vsyncadd [#allocation6], 0
      %s43 = sshll.u32 %s3, 4
      %s44 = int_to_ptr.hbm [resolvable:$true] %s43
      %s45 = sshll.u32 [#allocation7], 4
      %s46 = int_to_ptr.vmem [resolvable:$true] %s45
      %51 = dma.hbm_to_vmem [thread:$0]  %s44, 1024, %s46, [#allocation6], 64, 64, 4
    $region17: #{autoencoder_forward.1} parent=1 // pred_fallthru
      _
    // Predicated region
    $region18: #{autoencoder_forward.1} parent=1 // pred_check
      _
    $region19: #{autoencoder_forward.1} parent=1 // pred_check_branch
      %53 = sbr.rel (0) target = $region21
    $region20: #{autoencoder_forward.1} parent=1 // pred_region
      _
    $region21: #{autoencoder_forward.1} parent=1 // pred_fallthru
      _
    // Predicated region
    $region22: #{autoencoder_forward.1} parent=1 // pred_check
      _
    $region23: #{autoencoder_forward.1} parent=1 // pred_check_branch
      %55 = sbr.rel (0) target = $region25
    $region24: #{autoencoder_forward.1} parent=1 // pred_region
      %57 = dma.done [#allocation3], 64
    $region25: #{autoencoder_forward.1} parent=1 // pred_fallthru
      _
    // Predicated region
    $region26: #{autoencoder_forward.1} parent=1 // pred_check
      _
    $region27: #{autoencoder_forward.1} parent=1 // pred_check_branch
      %59 = sbr.rel (0) target = $region29
    $region28: #{autoencoder_forward.1} parent=1 // pred_region
      %61 = dma.done [#allocation6], 1024
    $region29: #{autoencoder_forward.1} parent=1 // pred_fallthru
      _
    // Predicated region
    $region30: #{autoencoder_forward.1} parent=1 // pred_check
      _
    $region31: #{autoencoder_forward.1} parent=1 // pred_check_branch
      %63 = sbr.rel (0) target = $region33
    $region32: #{autoencoder_forward.1} parent=1 // pred_region
      %65 = dma.done [#allocation6], 1024
    $region33: #{autoencoder_forward.1} parent=1 // pred_fallthru
      _
    %v66 = vld [vmem:[#allocation2] sm:$0xf]
    %v67 = vld [vmem:[#allocation5] sm:$0xf]
    %v68 = vld [vmem:[#allocation5 + $0x4] sm:$0xf]
    %v69 = vld [vmem:[#allocation5 + $0x8] sm:$0xf]
    %v70 = vld [vmem:[#allocation5 + $0xc] sm:$0xf]
    %v71 = vld [vmem:[#allocation5 + $0x10] sm:$0xf]
    %v72 = vld [vmem:[#allocation5 + $0x14] sm:$0xf]
    %v73 = vld [vmem:[#allocation5 + $0x18] sm:$0xf]
    %v74 = vld [vmem:[#allocation5 + $0x1c] sm:$0xf]
    %v75 = vld [vmem:[#allocation5 + $0x20] sm:$0xf]
    %v76 = vld [vmem:[#allocation5 + $0x24] sm:$0xf]
    %v77 = vld [vmem:[#allocation5 + $0x28] sm:$0xf]
    %v78 = vld [vmem:[#allocation5 + $0x2c] sm:$0xf]
    %v79 = vld [vmem:[#allocation5 + $0x30] sm:$0xf]
    %v80 = vld [vmem:[#allocation5 + $0x34] sm:$0xf]
    %v81 = vld [vmem:[#allocation5 + $0x38] sm:$0xf]
    %v82 = vld [vmem:[#allocation5 + $0x3c] sm:$0xf]
    %v83 = vld [vmem:[%s2] sm:$0x1]
    %v85 = vperm.slane %v83, 0
    %v103 = vunpack.c.l.b16 %v67
    %v104 = vunpack.c.l.b16 %v68
    %v105 = vunpack.c.l.b16 %v69
    %v106 = vunpack.c.l.b16 %v70
    %v107 = vunpack.c.l.b16 %v71
    %v108 = vunpack.c.l.b16 %v72
    %v109 = vunpack.c.l.b16 %v73
    %v110 = vunpack.c.l.b16 %v74
    %v111 = vunpack.c.l.b16 %v75
    %v112 = vunpack.c.l.b16 %v76
    %v113 = vunpack.c.l.b16 %v77
    %v114 = vunpack.c.l.b16 %v78
    %v115 = vunpack.c.l.b16 %v79
    %v116 = vunpack.c.l.b16 %v80
    %v117 = vunpack.c.l.b16 %v81
    %v118 = vunpack.c.l.b16 %v82
    %v119 = vpack.c.b16 %v104, %v103
    %v120 = vpack.c.b16 %v106, %v105
    %v121 = vpack.c.b16 %v108, %v107
    %v122 = vpack.c.b16 %v110, %v109
    %v123 = vpack.c.b16 %v112, %v111
    %v124 = vpack.c.b16 %v114, %v113
    %v125 = vpack.c.b16 %v116, %v115
    %v126 = vpack.c.b16 %v118, %v117
    %135 = vmatpush.bf16.msra.mxu0 %v126
    %136 = vmatpush.bf16.msra.mxu0 %v125
    %137 = vmatpush.bf16.msra.mxu0 %v124
    %138 = vmatpush.bf16.msra.mxu0 %v123
    %139 = vmatpush.bf16.msra.mxu0 %v122
    %140 = vmatpush.bf16.msra.mxu0 %v121
    %141 = vmatpush.bf16.msra.mxu0 %v120
    %142 = vmatpush.bf16.msra.mxu0 %v119
    %143 = vmatmul.bf16.gmra.mxu0 %v66
    %v144 = vpop.f32.mrf.mxu0
    %v145 = vadd.f32 %v85, %v144
    %v146 = vpop.f32.mrf.mxu0
    %147 = vdwg.mxu0
    %v148 = vmul.f32 %v145, 0.5
    %v149 = vtanh.pop %v148
    %v150 = vmul.f32 %v149, 0.5
    %v151 = vadd.f32 %v150, 0.5
    %v152 = vpack.c.bf16 %v151, %v151
    %v153 = vld [vmem:[#allocation7] sm:$0xf]
    %v154 = vld [vmem:[#allocation7 + $0x4] sm:$0xf]
    %v155 = vld [vmem:[#allocation7 + $0x8] sm:$0xf]
    %v156 = vld [vmem:[#allocation7 + $0xc] sm:$0xf]
    %v157 = vld [vmem:[#allocation7 + $0x10] sm:$0xf]
    %v158 = vld [vmem:[#allocation7 + $0x14] sm:$0xf]
    %v159 = vld [vmem:[#allocation7 + $0x18] sm:$0xf]
    %v160 = vld [vmem:[#allocation7 + $0x1c] sm:$0xf]
    %v161 = vld [vmem:[#allocation7 + $0x20] sm:$0xf]
    %v162 = vld [vmem:[#allocation7 + $0x24] sm:$0xf]
    %v163 = vld [vmem:[#allocation7 + $0x28] sm:$0xf]
    %v164 = vld [vmem:[#allocation7 + $0x2c] sm:$0xf]
    %v165 = vld [vmem:[#allocation7 + $0x30] sm:$0xf]
    %v166 = vld [vmem:[#allocation7 + $0x34] sm:$0xf]
    %v167 = vld [vmem:[#allocation7 + $0x38] sm:$0xf]
    %v168 = vld [vmem:[#allocation7 + $0x3c] sm:$0xf]
    %v169 = vld [vmem:[%s4] sm:$0x1]
    %v171 = vperm.slane %v169, 0
    %v189 = vunpack.c.l.b16 %v153
    %v190 = vunpack.c.l.b16 %v154
    %v191 = vunpack.c.l.b16 %v155
    %v192 = vunpack.c.l.b16 %v156
    %v193 = vunpack.c.l.b16 %v157
    %v194 = vunpack.c.l.b16 %v158
    %v195 = vunpack.c.l.b16 %v159
    %v196 = vunpack.c.l.b16 %v160
    %v197 = vunpack.c.l.b16 %v161
    %v198 = vunpack.c.l.b16 %v162
    %v199 = vunpack.c.l.b16 %v163
    %v200 = vunpack.c.l.b16 %v164
    %v201 = vunpack.c.l.b16 %v165
    %v202 = vunpack.c.l.b16 %v166
    %v203 = vunpack.c.l.b16 %v167
    %v204 = vunpack.c.l.b16 %v168
    %v205 = vpack.c.b16 %v190, %v189
    %v206 = vpack.c.b16 %v192, %v191
    %v207 = vpack.c.b16 %v194, %v193
    %v208 = vpack.c.b16 %v196, %v195
    %v209 = vpack.c.b16 %v198, %v197
    %v210 = vpack.c.b16 %v200, %v199
    %v211 = vpack.c.b16 %v202, %v201
    %v212 = vpack.c.b16 %v204, %v203
    %221 = vmatpush.bf16.msra.mxu0 %v212
    %222 = vmatpush.bf16.msra.mxu0 %v211
    %223 = vmatpush.bf16.msra.mxu0 %v210
    %224 = vmatpush.bf16.msra.mxu0 %v209
    %225 = vmatpush.bf16.msra.mxu0 %v208
    %226 = vmatpush.bf16.msra.mxu0 %v207
    %227 = vmatpush.bf16.msra.mxu0 %v206
    %228 = vmatpush.bf16.msra.mxu0 %v205
    %229 = vmatmul.bf16.gmra.mxu0 %v152
    %v230 = vpop.f32.mrf.mxu0
    %v231 = vadd.f32 %v171, %v230
    %v232 = vpop.f32.mrf.mxu0
    %233 = vdwg.mxu0
    %v234 = vmul.f32 %v231, 0.5
    %v235 = vtanh.pop %v234
    %v236 = vmul.f32 %v235, 0.5
    %v237 = vadd.f32 %v236, 0.5
    %v238 = vpack.c.bf16 %v237, %v237
    %239 = vst [vmem:[#allocation8] sm:$0xf] %v238
    // Predicated region
    $region34: #{autoencoder_forward.1} parent=1 // pred_check
      _
    $region35: #{autoencoder_forward.1} parent=1 // pred_check_branch
      %241 = sbr.rel (0) target = $region37
    $region36: #{autoencoder_forward.1} parent=1 // pred_region
      %243 = vsyncadd [#allocation4], 0
      %s245 = sshll.u32 [#allocation8], 4
      %s246 = int_to_ptr.vmem [resolvable:$true] %s245
      %s247 = sshll.u32 %s5, 4
      %s248 = int_to_ptr.hbm [resolvable:$true] %s247
      %250 = dma.vmem_to_hbm [thread:$0]  %s246, 64, %s248, [#allocation4]
    $region37: #{autoencoder_forward.1} parent=1 // pred_fallthru
      _
    // Predicated region
    $region38: #{autoencoder_forward.1} parent=1 // pred_check
      _
    $region39: #{autoencoder_forward.1} parent=1 // pred_check_branch
      %252 = sbr.rel (0) target = $region41
    $region40: #{autoencoder_forward.1} parent=1 // pred_region
      %254 = dma.done [#allocation4], 64
    $region41: #{autoencoder_forward.1} parent=1 // pred_fallthru
      _
    %255 = vsyncpa [#allocation3], 1
    %256 = vsyncpa [#allocation6], 1
    %257 = vsyncpa [#allocation4], 1

</llo_original>
